<compile_context>
chip_gen: v7x
topology: tpu7x:2x2x1
jax: 0.10.0
libtpu: 0.0.40
codegen_flags: <defaults>
</compile_context>

<pallas_src>
import jax
import jax.numpy as jnp
from jax.experimental import pallas as pl
from jax.experimental.pallas import tpu as pltpu

_SUBLANE = 8


def _round_up(x, m):
    return ((x + m - 1) // m) * m


def _dummy_embedder_kernel(tf_ref, m_ref, c_ref, o_ref):
    """Fused per-tile kernel.

    tf_ref: [bb, 4]  temporal features tile
    m_ref : [4, E]   folded weight (VMEM-resident across grid steps)
    c_ref : [1, E]   folded bias   (VMEM-resident across grid steps)
    o_ref : [bb, E]  output tile
    """
    out = jnp.dot(tf_ref[...], m_ref[...], preferred_element_type=jnp.float32)
    o_ref[...] = (out + c_ref[...]).astype(o_ref.dtype)


def fold_params(params):
    """Fold the 4 Linear(1,E) embedders + Linear(4E,E) fusion into (M, c).

    Call once per parameter update; not part of the per-call path.
      M: [4, E]   c: [1, E]
    """
    w_emb, b_emb, wf_t, bf = (params["w_emb"], params["b_emb"],
                              params["wf_t"], params["bf"])
    E = w_emb.shape[1]
    wf_blocks = wf_t.reshape(4, E, E)                      # block i = wf_t[i*E:(i+1)*E, :]
    M = jnp.einsum("ie,ief->if", w_emb, wf_blocks)         # [4, E]
    c = jnp.einsum("ie,ief->f", b_emb, wf_blocks)[None, :] + bf   # [1, E]
    return {"m": M.astype(jnp.float32),
            "c": c.astype(jnp.float32),
            "embedding_dim": E}


def _pick_block_b(B, E, *, block_b_cap=512, vmem_budget_bytes=16 << 20, out_bytes=4):
    """Batch tile size: as large as the VMEM budget allows (<= cap), sublane-
    aligned, and small enough that B >= 16 produces >= 2 grid steps (v7x cores)."""
    weight_bytes = 2 * (4 * E + E) * 4                 # M + c (allow double-buffer)
    avail = max(vmem_budget_bytes - weight_bytes, 1 << 16)
    per_row = 2 * (E * out_bytes + 4 * 4)              # double-buffered out row + tf row
    bb = (avail // per_row) // _SUBLANE * _SUBLANE
    bb = max(_SUBLANE, min(bb, block_b_cap))
    bb = min(bb, _round_up(B, _SUBLANE))               # never bigger than needed
    if B >= 2 * _SUBLANE:                              # keep both v7x TCs busy
        bb = min(bb, _round_up(-(-B // 2), _SUBLANE))
    return max(bb, _SUBLANE)


def dummy_embedder_forward(temporal_features, folded, *, out_dtype=jnp.float32,
                           block_b_cap=512, vmem_budget_bytes=16 << 20):
    """temporal_features: [B, 4] float32.  Returns [B, E] (out_dtype)."""
    m, c, E = folded["m"], folded["c"], folded["embedding_dim"]
    B = temporal_features.shape[0]
    x = temporal_features.astype(jnp.float32)

    out_bytes = jnp.dtype(out_dtype).itemsize
    bb = _pick_block_b(B, E, block_b_cap=block_b_cap,
                       vmem_budget_bytes=vmem_budget_bytes, out_bytes=out_bytes)
    grid = (pl.cdiv(B, bb),)

    out = pl.pallas_call(
        _dummy_embedder_kernel,
        out_shape=jax.ShapeDtypeStruct((B, E), out_dtype),
        grid=grid,
        in_specs=[
            pl.BlockSpec((bb, 4), lambda i: (i, 0)),   # tf tile (pipelined; boundary masked)
            pl.BlockSpec((4, E), lambda i: (0, 0)),    # folded weight (resident)
            pl.BlockSpec((1, E), lambda i: (0, 0)),    # folded bias (resident)
        ],
        out_specs=pl.BlockSpec((bb, E), lambda i: (i, 0)),
        compiler_params=pltpu.CompilerParams(
            dimension_semantics=(pltpu.PARALLEL,),
            vmem_limit_bytes=32 * 1024 * 1024),
    )(x, m, c)
    return out


def init_params(key, embedding_dim):
    """Deterministic synthetic parameters matching the PyTorch module shapes."""
    E = embedding_dim
    ks = jax.random.split(key, 4)
    # nn.Linear(1, E): weight [E, 1] -> stored as [E]; 4 embedders stacked: [4, E]
    w_emb = jax.random.normal(ks[0], (4, E), dtype=jnp.float32) * 0.1
    b_emb = jax.random.normal(ks[1], (4, E), dtype=jnp.float32) * 0.1
    # nn.Linear(4E, E): weight [E, 4E]; we keep its transpose [4E, E]
    wf = jax.random.normal(ks[2], (E, 4 * E), dtype=jnp.float32) * 0.05
    bf = jax.random.normal(ks[3], (1, E), dtype=jnp.float32) * 0.1
    return {"w_emb": w_emb, "b_emb": b_emb, "wf_t": wf.T, "bf": bf}


def reference_forward(temporal_features, params):
    """Pure-JAX reference mirroring the PyTorch forward (eval mode)."""
    w_emb, b_emb, wf_t, bf = (params["w_emb"], params["b_emb"],
                              params["wf_t"], params["bf"])
    embs = [temporal_features[:, i:i + 1] * w_emb[i:i + 1, :] + b_emb[i:i + 1, :]
            for i in range(4)]
    cat = jnp.concatenate(embs, axis=1)           # [B, 4E]
    return cat @ wf_t + bf                        # [B, E]


if __name__ == "__main__":
    E = 32
    key = jax.random.PRNGKey(0)
    k_param, k_x = jax.random.split(key)

    params = init_params(k_param, E)
    folded = fold_params(params)   # once per parameter update

    # B=8: single tile.  B=37: non-multiple of 8 (boundary-block masking) and
    # >=2 grid steps (exercises the multi-core-friendly path).
    for B in (8, 37):
        kx = jax.random.fold_in(k_x, B)
        # temporal features: [B, 4] = (day, week, month, year) scalars per sample
        x = jax.random.uniform(kx, (B, 4), dtype=jnp.float32, minval=0.0, maxval=12.0)

        out = dummy_embedder_forward(x, folded)
        out = jax.block_until_ready(out)

        ref = reference_forward(x, params)
        assert out.shape == (B, E)
        assert jnp.allclose(out, ref, atol=1e-4, rtol=1e-4), f"mismatch vs reference (B={B})"

    print("KERNEL_OK")
</pallas_src>

<mosaic_0001>
module attributes {stable_mosaic.version = 11 : i64} {
  func.func @_dummy_embedder_kernel(%arg0: i32, %arg1: memref<8x4xf32, #tpu.memory_space<vmem>>, %arg2: memref<4x32xf32, #tpu.memory_space<vmem>>, %arg3: memref<1x32xf32, #tpu.memory_space<vmem>>, %arg4: memref<8x32xf32, #tpu.memory_space<vmem>>) attributes {dimension_semantics = [#tpu.dimension_semantics<parallel>], iteration_bounds = array<i64: 1>, scalar_prefetch = 0 : i64, scratch_operands = 0 : i64, tpu.core_type = #tpu.core_type<tc>, window_params = [{transform_indices = @transform_0, window_bounds = array<i64: 8, 4>}, {pipeline_mode = #tpu.pipeline_mode<synchronous>, transform_indices = @transform_1, window_bounds = array<i64: 4, 32>}, {pipeline_mode = #tpu.pipeline_mode<synchronous>, transform_indices = @transform_2, window_bounds = array<i64: 1, 32>}, {transform_indices = @transform_3, window_bounds = array<i64: 8, 32>}]} {
    %c0 = arith.constant 0 : index
    %c0_0 = arith.constant 0 : index
    %0 = vector.load %arg1[%c0, %c0_0] : memref<8x4xf32, #tpu.memory_space<vmem>>, vector<8x4xf32>
    %c0_1 = arith.constant 0 : index
    %c0_2 = arith.constant 0 : index
    %1 = vector.load %arg2[%c0_1, %c0_2] : memref<4x32xf32, #tpu.memory_space<vmem>>, vector<4x32xf32>
    %cst = arith.constant dense<0.000000e+00> : vector<8x32xf32>
    %2 = tpu.matmul %0, %1, %cst {dimension_numbers = #tpu.dot_dimension_numbers<[1], [0], [0], [1], [0, 0, 1, 1], [], []>} : vector<8x4xf32>, vector<4x32xf32>, vector<8x32xf32> -> vector<8x32xf32>
    %c0_3 = arith.constant 0 : index
    %c0_4 = arith.constant 0 : index
    %3 = vector.load %arg3[%c0_3, %c0_4] : memref<1x32xf32, #tpu.memory_space<vmem>>, vector<1x32xf32>
    %4 = vector.broadcast %3 : vector<1x32xf32> to vector<8x32xf32>
    %5 = arith.addf %2, %4 : vector<8x32xf32>
    %c0_5 = arith.constant 0 : index
    %c0_6 = arith.constant 0 : index
    %6 = vector.load %arg4[%c0_5, %c0_6] : memref<8x32xf32, #tpu.memory_space<vmem>>, vector<8x32xf32>
    tpu.vector_store %arg4[%c0_5, %c0_6], %5 {strides = array<i32>} : memref<8x32xf32, #tpu.memory_space<vmem>>, vector<8x32xf32>,
    return
  }
  func.func @transform_0(%arg0: i32) -> (i32, i32) {
    %c0_i32 = arith.constant 0 : i32
    %c0_i32_0 = arith.constant 0 : i32
    return %arg0, %c0_i32 : i32, i32
  }
  func.func @transform_1(%arg0: i32) -> (i32, i32) {
    %c0_i32 = arith.constant 0 : i32
    %c0_i32_0 = arith.constant 0 : i32
    %c0_i32_1 = arith.constant 0 : i32
    return %c0_i32, %c0_i32_0 : i32, i32
  }
  func.func @transform_2(%arg0: i32) -> (i32, i32) {
    %c0_i32 = arith.constant 0 : i32
    %c0_i32_0 = arith.constant 0 : i32
    %c0_i32_1 = arith.constant 0 : i32
    return %c0_i32, %c0_i32_0 : i32, i32
  }
  func.func @transform_3(%arg0: i32) -> (i32, i32) {
    %c0_i32 = arith.constant 0 : i32
    %c0_i32_0 = arith.constant 0 : i32
    return %arg0, %c0_i32 : i32, i32
  }
}

</mosaic_0001>

<llo_original>
// kernel: tpu_custom_call.1
$region0: #{tpu_custom_call.1}
  #allocation0 [shape = 'u32[]', space=smem, size = 0x4, offset = 0x4, fixed_abs, tag = 'smem constant byte address 0x4 - core index']
  #allocation1 [shape = 'u32[144,128]{1,0:T(1,128)}', space=vmem, size = 0x12000, scoped, tag = 'internal scratch']
  %s0 = inlined_call_operand.vmem [shape: f32[8,4], index: 0, kind: input, shape index: {}]
  %s1 = inlined_call_operand.vmem [shape: f32[4,32], index: 1, kind: input, shape index: {}]
  %s2 = inlined_call_operand.vmem [shape: f32[1,32], index: 2, kind: input, shape index: {}]
  %s3 = inlined_call_operand.hbm [shape: f32[8,32], index: 3, kind: output, shape index: {}]
  %s4 = sld [smem:[#allocation0]]
  $region22: #{tpu_custom_call.1} parent=0
    _
  %s6 = ssub.s32 1, %s4
  %s7 = scalar_select 0, %s6, %s4
  $region1: #{tpu_custom_call.1} parent=0
    #allocation2 [shape = 'u8[4096]{0}', space=vmem, size = 0x1000, scoped, tag = 'output window, operand 0, single buffered']
    #allocation3 [shape = 's32[1]{0}', space=sflag, size = 0x4, scoped, tag = 'scoped memory for tpu_custom_call.1']
    %8 = vsyncpa [#allocation3], 0
    // Predicated region
    $region2: #{tpu_custom_call.1} parent=1 // pred_check
      _
    $region3: #{tpu_custom_call.1} parent=1 // pred_check_branch
      %10 = sbr.rel (0) target = $region5
    $region4: #{tpu_custom_call.1} parent=1 // pred_region
      _
    $region5: #{tpu_custom_call.1} parent=1 // pred_fallthru
      _
    // Predicated region
    $region6: #{tpu_custom_call.1} parent=1 // pred_check
      _
    $region7: #{tpu_custom_call.1} parent=1 // pred_check_branch
      %12 = sbr.rel (0) target = $region9
    $region8: #{tpu_custom_call.1} parent=1 // pred_region
      _
    $region9: #{tpu_custom_call.1} parent=1 // pred_fallthru
      _
    // Predicated region
    $region10: #{tpu_custom_call.1} parent=1 // pred_check
      _
    $region11: #{tpu_custom_call.1} parent=1 // pred_check_branch
      %14 = sbr.rel (0) target = $region13
    $region12: #{tpu_custom_call.1} parent=1 // pred_region
      _
    $region13: #{tpu_custom_call.1} parent=1 // pred_fallthru
      _
    %v15 = vld [vmem:[%s0] sm:$0xff]
    %v16 = vld [vmem:[%s1] sm:$0xf]
    %v17 = vld [vmem:[%s2] sm:$0x1]
    %v19 = vlaneseq
    %v20 = vshrl.u32 %v19, 7
    %v21 = vsub.s32 0, %v20
    %v22 = vrot.slane %v17, %v21
    %vm24 = vcmask 31744
    %v26 = vsel %vm24, %v15, 0
    %vm28 = vcmask 1043456
    %v30 = vsel %vm28, %v16, 0
    %32 = vmatprep.subr.mxu0 0.0
    %33 = vmatpush1.msra.mxu0 %v30
    %34 = vmatprep.subr.mxu0 0.0
    %35 = vmatpush1.msra.mxu0 0.0
    %36 = vmatprep.subr.mxu0 0.0
    %37 = vmatpush1.msra.mxu0 0.0
    %38 = vmatprep.subr.mxu0 0.0
    %39 = vmatpush1.msra.mxu0 0.0
    %40 = vmatprep.subr.mxu0 0.0
    %41 = vmatpush1.msra.mxu0 0.0
    %42 = vmatprep.subr.mxu0 0.0
    %43 = vmatpush1.msra.mxu0 0.0
    %44 = vmatprep.subr.mxu0 0.0
    %45 = vmatpush1.msra.mxu0 0.0
    %46 = vmatprep.subr.mxu0 0.0
    %47 = vmatpush1.msra.mxu0 0.0
    %48 = vmatprep.subr.mxu0 0.0
    %49 = vmatpush1.msra.mxu0 0.0
    %50 = vmatprep.subr.mxu0 0.0
    %51 = vmatpush1.msra.mxu0 0.0
    %52 = vmatprep.subr.mxu0 0.0
    %53 = vmatpush1.msra.mxu0 0.0
    %54 = vmatprep.subr.mxu0 0.0
    %55 = vmatpush1.msra.mxu0 0.0
    %56 = vmatprep.subr.mxu0 0.0
    %57 = vmatpush1.msra.mxu0 0.0
    %58 = vmatprep.subr.mxu0 0.0
    %59 = vmatpush1.msra.mxu0 0.0
    %60 = vmatprep.subr.mxu0 0.0
    %61 = vmatpush1.msra.mxu0 0.0
    %62 = vmatprep.subr.mxu0 0.0
    %63 = vmatpush1.msra.mxu0 0.0
    %64 = vmatprep.subr.mxu0 0.0
    %65 = vmatpush1.msra.mxu0 0.0
    %66 = vmatprep.subr.mxu0 0.0
    %67 = vmatpush1.msra.mxu0 0.0
    %68 = vmatprep.subr.mxu0 0.0
    %69 = vmatpush1.msra.mxu0 0.0
    %70 = vmatprep.subr.mxu0 0.0
    %71 = vmatpush1.msra.mxu0 0.0
    %72 = vmatprep.subr.mxu0 0.0
    %73 = vmatpush1.msra.mxu0 0.0
    %74 = vmatprep.subr.mxu0 0.0
    %75 = vmatpush1.msra.mxu0 0.0
    %76 = vmatprep.subr.mxu0 0.0
    %77 = vmatpush1.msra.mxu0 0.0
    %78 = vmatprep.subr.mxu0 0.0
    %79 = vmatpush1.msra.mxu0 0.0
    %80 = vmatprep.subr.mxu0 0.0
    %81 = vmatpush1.msra.mxu0 0.0
    %82 = vmatprep.subr.mxu0 0.0
    %83 = vmatpush1.msra.mxu0 0.0
    %84 = vmatprep.subr.mxu0 0.0
    %85 = vmatpush1.msra.mxu0 0.0
    %86 = vmatprep.subr.mxu0 0.0
    %87 = vmatpush1.msra.mxu0 0.0
    %88 = vmatprep.subr.mxu0 0.0
    %89 = vmatpush1.msra.mxu0 0.0
    %90 = vmatprep.subr.mxu0 0.0
    %91 = vmatpush1.msra.mxu0 0.0
    %92 = vmatprep.subr.mxu0 0.0
    %93 = vmatpush1.msra.mxu0 0.0
    %94 = vmatprep.subr.mxu0 0.0
    %95 = vmatpush1.msra.mxu0 0.0
    %96 = vmatprep.mubr.f32.mxu0 0.0
    %97 = vmatmul.mubr.f32.gmra.mrb[0].mxu0 %v26
    %v98 = vpop.f32.mrb[0].mxu0
    %v99 = vadd.f32 %v22, %v98
    %v100 = vpop.f32.mrb[0].mxu0
    %101 = vdwg.mxu0
    %vm102 = vcmask 261120
    %103 = vst.msk [vmem:[#allocation2] sm:$0xff] %vm102, %v99
    // Predicated region
    $region14: #{tpu_custom_call.1} parent=1 // pred_check
      _
    $region15: #{tpu_custom_call.1} parent=1 // pred_check_branch
      %105 = sbr.rel (0) target = $region17
    $region16: #{tpu_custom_call.1} parent=1 // pred_region
      %s107 = ssub.s32 128, 128
      %108 = vsyncadd [#allocation3], %s107
      %s110 = sshll.u32 [#allocation2], 4
      %s111 = int_to_ptr.vmem [resolvable:$true] %s110
      %113 = dma.vmem_to_hbm [thread:$0]  %s111, 128, %s3, [#allocation3]
    $region17: #{tpu_custom_call.1} parent=1 // pred_fallthru
      _
    // Predicated region
    $region18: #{tpu_custom_call.1} parent=1 // pred_check
      _
    $region19: #{tpu_custom_call.1} parent=1 // pred_check_branch
      %115 = sbr.rel (0) target = $region21
    $region20: #{tpu_custom_call.1} parent=1 // pred_region
      %116 = dma.done [#allocation3], 128
    $region21: #{tpu_custom_call.1} parent=1 // pred_fallthru
      _
    %117 = vsyncpa [#allocation3], 1

</llo_original>
